<compile_context>
chip_gen: v7x
topology: tpu7x:2x2x1
jax: 0.10.0
libtpu: 0.0.40
codegen_flags: <defaults>
</compile_context>

<pallas_src>
import math

import jax
import jax.numpy as jnp
from jax.experimental import pallas as pl
from jax.experimental.pallas import tpu as pltpu


def _round_up(x, m):
    return (x + m - 1) // m * m


def _vmem_capacity_bytes():
    """Physical VMEM of the local chip; conservative (v7x) fallback."""
    try:
        return int(pltpu.get_tpu_info().vmem_capacity_bytes)
    except Exception:
        return 64 << 20


def _tiles_bytes(tm, tv, d_model, act_isize, w_isize, out_isize):
    """Double-buffered VMEM footprint of one grid step's tiles."""
    return 2 * (
        tm * d_model * act_isize      # x tile
        + d_model * tv * w_isize      # W tile (dominant)
        + tv * 4                      # bias tile (f32)
        + tm * tv * out_isize         # output tile
    )


def _select_tiles(M, d_model, Vw, act_isize, w_isize, out_isize, budget_bytes):
    """Pick (tm, tv).

    tm is grown first — it sets MXU row occupancy and, when M ends up on the
    outer grid axis, the weight-amortization factor.  tv only needs to be
    lane-dense (>=512 preferred) for unmasked vst / long DMA rows.
    """
    # -- tm --
    if M <= 512:
        tm = _round_up(max(M, 8), 8)     # whole activation resident (decode / small prefill)
    else:
        tm = 512
    # -- tv (upper target) --
    tv = min(_round_up(Vw, 128), 2048)

    def fits(tm_, tv_):
        return _tiles_bytes(tm_, tv_, d_model, act_isize, w_isize, out_isize) <= budget_bytes

    # Shrink tv first (down to 512), then tm, then tv again — keep the
    # traffic-amortizing tm as large as possible.
    while tv > 512 and not fits(tm, tv):
        tv = max(512, _round_up(tv // 2, 128))
    while tm > 128 and not fits(tm, tv):
        tm = max(128, _round_up(tm // 2, 8))
    while tv > 128 and not fits(tm, tv):
        tv = max(128, _round_up(tv // 2, 128))

    # Prefer a tv that tiles the stored vocab dim exactly, so the per-call
    # wrapper never has to copy/pad the full weight.
    if Vw <= tv:
        tv = Vw                          # single vocab tile (block dim == full dim: allowed)
    elif Vw % tv != 0:
        d = (tv // 128) * 128
        while d >= 128 and Vw % d != 0:
            d -= 128
        if d >= 128:
            tv = d                       # largest 128-multiple divisor of Vw
        # else: keep tv; caller falls back to a one-off pad (rare — use
        # prepare_generator_params to avoid it entirely).
    return tm, tv


def prepare_generator_params(weight, bias, *, param_dtype=None, vocab_multiple=256):
    """One-time parameter prep OUTSIDE the hot path.

    Casts the weight to the desired MXU-feed dtype (e.g. bf16) and pads the
    vocab dim to a lane/tile-friendly multiple, so the per-call wrapper never
    reads/writes the full weight again.  Returns (weight_p, bias_p, vocab).
    """
    d_model, vocab = weight.shape
    if param_dtype is not None:
        weight = weight.astype(param_dtype)
    bias_p = bias.astype(jnp.float32)
    Vp = _round_up(vocab, vocab_multiple)
    if Vp != vocab:
        weight = jnp.pad(weight, ((0, 0), (0, Vp - vocab)))
        bias_p = jnp.pad(bias_p, (0, Vp - vocab))
    return weight, bias_p, vocab


def _generator_kernel(x_ref, w_ref, b_ref, o_ref):
    # x_ref: (tm, d_model)  w_ref: (d_model, tv)  b_ref: (1, tv) f32  o_ref: (tm, tv)
    acc = jnp.dot(x_ref[...], w_ref[...], preferred_element_type=jnp.float32)
    o_ref[...] = (acc + b_ref[...]).astype(o_ref.dtype)


def generator_forward(x, weight, bias, *, vocab=None, tm=None, tv=None):
    """Linear projection y = x @ weight + bias.

    x:      [..., d_model]
    weight: [d_model, Vw]   (possibly pre-padded / pre-cast via prepare_generator_params)
    bias:   [Vw] or [vocab]
    vocab:  logical vocab size (defaults to weight.shape[-1])
    returns [..., vocab] in x.dtype
    """
    orig_shape = x.shape
    d_model = orig_shape[-1]
    Vw = weight.shape[-1]
    if vocab is None:
        vocab = Vw
    out_dtype = x.dtype

    x2d = x.reshape(-1, d_model)
    M = x2d.shape[0]
    # The stored weight sets the MXU-feed dtype: cast the small activation,
    # never the weight, per call.
    if x2d.dtype != weight.dtype:
        x2d = x2d.astype(weight.dtype)

    bias2d = bias.astype(jnp.float32).reshape(1, -1)
    if bias2d.shape[-1] != Vw:            # bias is tiny; padding it is cheap
        bias2d = jnp.pad(bias2d, ((0, 0), (0, Vw - bias2d.shape[-1])))

    act_isize = jnp.dtype(x2d.dtype).itemsize
    w_isize = jnp.dtype(weight.dtype).itemsize
    out_isize = jnp.dtype(out_dtype).itemsize

    capacity = _vmem_capacity_bytes()
    # ~96 MiB on 128 MiB-VMEM chips (v5e/v6e), ~48 MiB on v7x (64 MiB).
    budget = max(32 << 20, (capacity * 3) // 4)

    tm_auto, tv_auto = _select_tiles(M, d_model, Vw, act_isize, w_isize, out_isize, budget)
    if tm is None:
        tm = tm_auto
    if tv is None:
        tv = tv_auto
    # Validate user-supplied tiles against the physical-VMEM-derived budget
    # (a too-large request would fail / fault on v7x's 64 MiB VMEM).
    if _tiles_bytes(tm, tv, d_model, act_isize, w_isize, out_isize) > budget:
        tm, tv = tm_auto, tv_auto

    # Pad the activation (cheap) to a tile multiple.
    Mp = _round_up(M, tm)
    if Mp != M:
        x2d = jnp.pad(x2d, ((0, Mp - M), (0, 0)))

    # Rare fallback: no friendly divisor of the stored vocab dim -> pad W per
    # call.  Prefer prepare_generator_params() to do this once outside the hot path.
    if Vw % tv == 0:
        Vp = Vw
    else:
        Vp = _round_up(Vw, tv)
        weight = jnp.pad(weight, ((0, 0), (0, Vp - Vw)))
        bias2d = jnp.pad(bias2d, ((0, 0), (0, Vp - Vw)))

    n_m = Mp // tm
    n_v = Vp // tv

    # Put the operand that is more expensive to re-stream on the OUTER grid
    # axis: its block index only changes with the outer counter, so Pallas
    # DMAs it once and keeps it resident across the whole inner loop.  For the
    # LM head (vocab >> M) that is the weight; the vocab axis then leads the
    # grid so v7x's two TensorCores each stream only half of W.
    x_bytes = Mp * d_model * act_isize
    w_bytes = d_model * Vp * w_isize
    vocab_outer = w_bytes * (n_m - 1) >= x_bytes * (n_v - 1)

    if vocab_outer:
        grid = (n_v, n_m)
        x_spec = pl.BlockSpec((tm, d_model), lambda j, i: (i, 0))
        w_spec = pl.BlockSpec((d_model, tv), lambda j, i: (0, j))   # resident across inner M loop
        b_spec = pl.BlockSpec((1, tv), lambda j, i: (0, j))
        o_spec = pl.BlockSpec((tm, tv), lambda j, i: (i, j))
    else:
        grid = (n_m, n_v)
        x_spec = pl.BlockSpec((tm, d_model), lambda i, j: (i, 0))   # resident across inner vocab loop
        w_spec = pl.BlockSpec((d_model, tv), lambda i, j: (0, j))
        b_spec = pl.BlockSpec((1, tv), lambda i, j: (0, j))
        o_spec = pl.BlockSpec((tm, tv), lambda i, j: (i, j))

    # Scoped VMEM: enough for the double-buffered tiles plus headroom, clamped
    # to physical capacity minus headroom (v7x-safe).
    needed = _tiles_bytes(tm, tv, d_model, act_isize, w_isize, out_isize)
    headroom = 8 << 20
    vmem_limit = int(min(max(needed + headroom, 32 << 20), capacity - headroom))
    vmem_limit = max(vmem_limit, needed)

    out = pl.pallas_call(
        _generator_kernel,
        out_shape=jax.ShapeDtypeStruct((Mp, Vp), out_dtype),
        grid_spec=pltpu.PrefetchScalarGridSpec(
            num_scalar_prefetch=0,
            grid=grid,
            in_specs=[x_spec, w_spec, b_spec],
            out_specs=o_spec,
        ),
        compiler_params=pltpu.CompilerParams(
            dimension_semantics=("parallel", "parallel"),
            vmem_limit_bytes=vmem_limit,
        ),
    )(x2d, weight, bias2d)

    out = out[:M, :vocab]
    return out.reshape(*orig_shape[:-1], vocab)


if __name__ == "__main__":
    # Small shapes consistent with the module.
    batch, seq, d_model, vocab = 2, 8, 32, 512

    key = jax.random.PRNGKey(0)
    kx, kw, kb = jax.random.split(key, 3)

    # Deterministic init mimicking nn.Linear default (U[-1/sqrt(d), 1/sqrt(d)]).
    bound = 1.0 / math.sqrt(d_model)
    weight = jax.random.uniform(
        kw, (d_model, vocab), minval=-bound, maxval=bound, dtype=jnp.float32
    )
    bias = jax.random.uniform(
        kb, (vocab,), minval=-bound, maxval=bound, dtype=jnp.float32
    )
    x = jax.random.normal(kx, (batch, seq, d_model), dtype=jnp.float32)
    y_ref = x @ weight + bias

    # 1) f32 weights — exact semantics of nn.Linear forward.
    y = jax.block_until_ready(generator_forward(x, weight, bias))
    assert y.shape == (batch, seq, vocab)
    assert jnp.allclose(y, y_ref, atol=1e-5, rtol=1e-5)

    # 2) Recommended perf path: bf16-stored weights, prepared ONCE outside the
    #    hot path (no per-call cast/pad of W).  f32 accumulation, looser tol.
    w_bf16, b_prep, v_logical = prepare_generator_params(
        weight, bias, param_dtype=jnp.bfloat16
    )
    y_bf = jax.block_until_ready(
        generator_forward(x, w_bf16, b_prep, vocab=v_logical)
    )
    assert y_bf.shape == (batch, seq, vocab)
    assert jnp.allclose(y_bf, y_ref, atol=5e-2, rtol=5e-2)

    # 3) Non-tile-aligned shapes (seq=7, vocab=200): handled without any
    #    per-call weight copy (single full-dim vocab tile + cheap x pad).
    x2 = jax.random.normal(kx, (2, 7, d_model), dtype=jnp.float32)
    w2 = weight[:, :200]
    b2 = bias[:200]
    y2 = jax.block_until_ready(generator_forward(x2, w2, b2))
    assert jnp.allclose(y2, x2 @ w2 + b2, atol=1e-5, rtol=1e-5)

    print("KERNEL_OK")
</pallas_src>

<mosaic_0001>
module attributes {stable_mosaic.version = 11 : i64} {
  func.func @_generator_kernel(%arg0: i32, %arg1: i32, %arg2: memref<16x32xf32, #tpu.memory_space<vmem>>, %arg3: memref<32x512xf32, #tpu.memory_space<vmem>>, %arg4: memref<1x512xf32, #tpu.memory_space<vmem>>, %arg5: memref<16x512xf32, #tpu.memory_space<vmem>>) attributes {dimension_semantics = [#tpu.dimension_semantics<parallel>, #tpu.dimension_semantics<parallel>], iteration_bounds = array<i64: 1, 1>, scalar_prefetch = 0 : i64, scratch_operands = 0 : i64, tpu.core_type = #tpu.core_type<tc>, window_params = [{transform_indices = @transform_0, window_bounds = array<i64: 16, 32>}, {transform_indices = @transform_1, window_bounds = array<i64: 32, 512>}, {transform_indices = @transform_2, window_bounds = array<i64: 1, 512>}, {transform_indices = @transform_3, window_bounds = array<i64: 16, 512>}]} {
    %c0 = arith.constant 0 : index
    %c0_0 = arith.constant 0 : index
    %0 = vector.load %arg2[%c0, %c0_0] : memref<16x32xf32, #tpu.memory_space<vmem>>, vector<16x32xf32>
    %c0_1 = arith.constant 0 : index
    %c0_2 = arith.constant 0 : index
    %1 = vector.load %arg3[%c0_1, %c0_2] : memref<32x512xf32, #tpu.memory_space<vmem>>, vector<32x512xf32>
    %cst = arith.constant dense<0.000000e+00> : vector<16x512xf32>
    %2 = tpu.matmul %0, %1, %cst {dimension_numbers = #tpu.dot_dimension_numbers<[1], [0], [0], [1], [0, 0, 1, 1], [], []>} : vector<16x32xf32>, vector<32x512xf32>, vector<16x512xf32> -> vector<16x512xf32>
    %c0_3 = arith.constant 0 : index
    %c0_4 = arith.constant 0 : index
    %3 = vector.load %arg4[%c0_3, %c0_4] : memref<1x512xf32, #tpu.memory_space<vmem>>, vector<1x512xf32>
    %4 = vector.broadcast %3 : vector<1x512xf32> to vector<16x512xf32>
    %5 = arith.addf %2, %4 : vector<16x512xf32>
    %c0_5 = arith.constant 0 : index
    %c0_6 = arith.constant 0 : index
    %6 = vector.load %arg5[%c0_5, %c0_6] : memref<16x512xf32, #tpu.memory_space<vmem>>, vector<16x512xf32>
    tpu.vector_store %arg5[%c0_5, %c0_6], %5 {strides = array<i32>} : memref<16x512xf32, #tpu.memory_space<vmem>>, vector<16x512xf32>,
    return
  }
  func.func @transform_0(%arg0: i32, %arg1: i32) -> (i32, i32) {
    %c0_i32 = arith.constant 0 : i32
    %c0_i32_0 = arith.constant 0 : i32
    return %arg1, %c0_i32 : i32, i32
  }
  func.func @transform_1(%arg0: i32, %arg1: i32) -> (i32, i32) {
    %c0_i32 = arith.constant 0 : i32
    %c0_i32_0 = arith.constant 0 : i32
    return %c0_i32, %arg0 : i32, i32
  }
  func.func @transform_2(%arg0: i32, %arg1: i32) -> (i32, i32) {
    %c0_i32 = arith.constant 0 : i32
    %c0_i32_0 = arith.constant 0 : i32
    return %c0_i32, %arg0 : i32, i32
  }
  func.func @transform_3(%arg0: i32, %arg1: i32) -> (i32, i32) {
    %c0_i32 = arith.constant 0 : i32
    return %arg1, %arg0 : i32, i32
  }
}

</mosaic_0001>

<llo_original>
// kernel: tpu_custom_call.1
$region0: #{tpu_custom_call.1}
  #allocation0 [shape = 'u32[]', space=smem, size = 0x4, offset = 0x4, fixed_abs, tag = 'smem constant byte address 0x4 - core index']
  #allocation1 [shape = 'u32[144,128]{1,0:T(1,128)}', space=vmem, size = 0x12000, scoped, tag = 'internal scratch']
  %s0 = inlined_call_operand.hbm [shape: f32[16,32], index: 0, kind: input, shape index: {}]
  %s1 = inlined_call_operand.hbm [shape: f32[32,512], index: 1, kind: input, shape index: {}]
  %s2 = inlined_call_operand.vmem [shape: f32[1,512], index: 2, kind: input, shape index: {}]
  %s3 = inlined_call_operand.hbm [shape: f32[16,512], index: 3, kind: output, shape index: {}]
  %s4 = sld [smem:[#allocation0]]
  $region30: #{tpu_custom_call.1} parent=0
    _
  %s6 = ssub.s32 1, %s4
  %s7 = scalar_select 0, %s6, %s4
  $region1: #{tpu_custom_call.1} parent=0
    #allocation2 [shape = 'u8[8192]{0}', space=vmem, size = 0x2000, scoped, tag = 'input window, operand 0, single buffered']
    #allocation3 [shape = 's32[1]{0}', space=sflag, size = 0x4, scoped, tag = 'scoped memory for tpu_custom_call.1']
    #allocation4 [shape = 's32[1]{0}', space=sflag, size = 0x4, scoped, tag = 'scoped memory for tpu_custom_call.1']
    #allocation5 [shape = 'u8[65536]{0}', space=vmem, size = 0x10000, scoped, tag = 'input window, operand 1, single buffered']
    #allocation6 [shape = 's32[1]{0}', space=sflag, size = 0x4, scoped, tag = 'scoped memory for tpu_custom_call.1']
    #allocation7 [shape = 'u8[32768]{0}', space=vmem, size = 0x8000, scoped, tag = 'output window, operand 0, single buffered']
    %8 = vsyncpa [#allocation3], 0
    %9 = vsyncpa [#allocation6], 0
    %10 = vsyncpa [#allocation4], 0
    // Predicated region
    $region2: #{tpu_custom_call.1} parent=1 // pred_check
      _
    $region3: #{tpu_custom_call.1} parent=1 // pred_check_branch
      %12 = sbr.rel (0) target = $region5
    $region4: #{tpu_custom_call.1} parent=1 // pred_region
      %s14 = ssub.s32 256, 256
      %15 = vsyncadd [#allocation3], %s14
      %s16 = sshll.u32 [#allocation2], 4
      %s17 = int_to_ptr.vmem [resolvable:$true] %s16
      %22 = dma.hbm_to_vmem [thread:$0]  %s0, 256, %s17, [#allocation3], 128, 128, 8
    $region5: #{tpu_custom_call.1} parent=1 // pred_fallthru
      _
    // Predicated region
    $region6: #{tpu_custom_call.1} parent=1 // pred_check
      _
    $region7: #{tpu_custom_call.1} parent=1 // pred_check_branch
      %24 = sbr.rel (0) target = $region9
    $region8: #{tpu_custom_call.1} parent=1 // pred_region
      %s26 = ssub.s32 2048, 2048
      %27 = vsyncadd [#allocation6], %s26
      %s28 = sshll.u32 [#allocation5], 4
      %s29 = int_to_ptr.vmem [resolvable:$true] %s28
      %34 = dma.hbm_to_vmem [thread:$0]  %s1, 2048, %s29, [#allocation6], 512, 512, 32
    $region9: #{tpu_custom_call.1} parent=1 // pred_fallthru
      _
    // Predicated region
    $region10: #{tpu_custom_call.1} parent=1 // pred_check
      _
    $region11: #{tpu_custom_call.1} parent=1 // pred_check_branch
      %36 = sbr.rel (0) target = $region13
    $region12: #{tpu_custom_call.1} parent=1 // pred_region
      _
    $region13: #{tpu_custom_call.1} parent=1 // pred_fallthru
      _
    // Predicated region
    $region14: #{tpu_custom_call.1} parent=1 // pred_check
      _
    $region15: #{tpu_custom_call.1} parent=1 // pred_check_branch
      %38 = sbr.rel (0) target = $region17
    $region16: #{tpu_custom_call.1} parent=1 // pred_region
      %39 = dma.done [#allocation3], 256
    $region17: #{tpu_custom_call.1} parent=1 // pred_fallthru
      _
    // Predicated region
    $region18: #{tpu_custom_call.1} parent=1 // pred_check
      _
    $region19: #{tpu_custom_call.1} parent=1 // pred_check_branch
      %41 = sbr.rel (0) target = $region21
    $region20: #{tpu_custom_call.1} parent=1 // pred_region
      %42 = dma.done [#allocation6], 2048
    $region21: #{tpu_custom_call.1} parent=1 // pred_fallthru
      _
    %v43 = vld [vmem:[#allocation2] sm:$0xff]
    %v44 = vld [vmem:[#allocation2 + $0x8] sm:$0xff]
    %v45 = vld [vmem:[#allocation5] sm:$0xff]
    %v46 = vld [vmem:[#allocation5 + $0x8] sm:$0xff]
    %v47 = vld [vmem:[#allocation5 + $0x10] sm:$0xff]
    %v48 = vld [vmem:[#allocation5 + $0x18] sm:$0xff]
    %v49 = vld [vmem:[#allocation5 + $0x20] sm:$0xff]
    %v50 = vld [vmem:[#allocation5 + $0x28] sm:$0xff]
    %v51 = vld [vmem:[#allocation5 + $0x30] sm:$0xff]
    %v52 = vld [vmem:[#allocation5 + $0x38] sm:$0xff]
    %v53 = vld [vmem:[#allocation5 + $0x40] sm:$0xff]
    %v54 = vld [vmem:[#allocation5 + $0x48] sm:$0xff]
    %v55 = vld [vmem:[#allocation5 + $0x50] sm:$0xff]
    %v56 = vld [vmem:[#allocation5 + $0x58] sm:$0xff]
    %v57 = vld [vmem:[#allocation5 + $0x60] sm:$0xff]
    %v58 = vld [vmem:[#allocation5 + $0x68] sm:$0xff]
    %v59 = vld [vmem:[#allocation5 + $0x70] sm:$0xff]
    %v60 = vld [vmem:[#allocation5 + $0x78] sm:$0xff]
    %v61 = vld [vmem:[%s2] sm:$0xf]
    %v63 = vlaneseq
    %v64 = vshrl.u32 %v63, 7
    %v65 = vsub.s32 0, %v64
    %v66 = vrot.slane %v61, %v65
    %v67 = vlaneseq
    %v68 = vshrl.u32 %v67, 7
    %v69 = vsub.s32 1, %v68
    %v70 = vrot.slane %v61, %v69
    %v71 = vlaneseq
    %v72 = vshrl.u32 %v71, 7
    %v73 = vsub.s32 2, %v72
    %v74 = vrot.slane %v61, %v73
    %v75 = vlaneseq
    %v76 = vshrl.u32 %v75, 7
    %v77 = vsub.s32 3, %v76
    %v78 = vrot.slane %v61, %v77
    %vm83 = vcmask 261120
    %v85 = vsel %vm83, %v43, 0
    %v88 = vsel %vm83, %v44, 0
    %90 = vmatprep.subr.mxu0 %v46
    %91 = vmatpush1.msra.mxu0 %v45
    %92 = vmatprep.subr.mxu0 %v50
    %93 = vmatpush1.msra.mxu0 %v49
    %94 = vmatprep.subr.mxu0 %v54
    %95 = vmatpush1.msra.mxu0 %v53
    %96 = vmatprep.subr.mxu0 %v58
    %97 = vmatpush1.msra.mxu0 %v57
    %98 = vmatprep.subr.mxu0 0.0
    %99 = vmatpush1.msra.mxu0 0.0
    %100 = vmatprep.subr.mxu0 0.0
    %101 = vmatpush1.msra.mxu0 0.0
    %102 = vmatprep.subr.mxu0 0.0
    %103 = vmatpush1.msra.mxu0 0.0
    %104 = vmatprep.subr.mxu0 0.0
    %105 = vmatpush1.msra.mxu0 0.0
    %106 = vmatprep.subr.mxu0 0.0
    %107 = vmatpush1.msra.mxu0 0.0
    %108 = vmatprep.subr.mxu0 0.0
    %109 = vmatpush1.msra.mxu0 0.0
    %110 = vmatprep.subr.mxu0 0.0
    %111 = vmatpush1.msra.mxu0 0.0
    %112 = vmatprep.subr.mxu0 0.0
    %113 = vmatpush1.msra.mxu0 0.0
    %114 = vmatprep.subr.mxu0 0.0
    %115 = vmatpush1.msra.mxu0 0.0
    %116 = vmatprep.subr.mxu0 0.0
    %117 = vmatpush1.msra.mxu0 0.0
    %118 = vmatprep.subr.mxu0 0.0
    %119 = vmatpush1.msra.mxu0 0.0
    %120 = vmatprep.subr.mxu0 0.0
    %121 = vmatpush1.msra.mxu0 0.0
    %122 = vmatprep.subr.mxu0 0.0
    %123 = vmatpush1.msra.mxu0 0.0
    %124 = vmatprep.subr.mxu0 0.0
    %125 = vmatpush1.msra.mxu0 0.0
    %126 = vmatprep.subr.mxu0 0.0
    %127 = vmatpush1.msra.mxu0 0.0
    %128 = vmatprep.subr.mxu0 0.0
    %129 = vmatpush1.msra.mxu0 0.0
    %130 = vmatprep.subr.mxu0 0.0
    %131 = vmatpush1.msra.mxu0 0.0
    %132 = vmatprep.subr.mxu0 0.0
    %133 = vmatpush1.msra.mxu0 0.0
    %134 = vmatprep.subr.mxu0 0.0
    %135 = vmatpush1.msra.mxu0 0.0
    %136 = vmatprep.subr.mxu0 0.0
    %137 = vmatpush1.msra.mxu0 0.0
    %138 = vmatprep.subr.mxu0 0.0
    %139 = vmatpush1.msra.mxu0 0.0
    %140 = vmatprep.subr.mxu0 0.0
    %141 = vmatpush1.msra.mxu0 0.0
    %142 = vmatprep.subr.mxu0 0.0
    %143 = vmatpush1.msra.mxu0 0.0
    %144 = vmatprep.subr.mxu0 0.0
    %145 = vmatpush1.msra.mxu0 0.0
    %146 = vmatprep.subr.mxu0 0.0
    %147 = vmatpush1.msra.mxu0 0.0
    %148 = vmatprep.subr.mxu0 0.0
    %149 = vmatpush1.msra.mxu0 0.0
    %150 = vmatprep.subr.mxu0 0.0
    %151 = vmatpush1.msra.mxu0 0.0
    %152 = vmatprep.subr.mxu0 0.0
    %153 = vmatpush1.msra.mxu0 0.0
    %154 = vmatprep.mubr.f32.mxu0 0.0
    %155 = vmatmul.mubr.f32.gmra.mrb[0].mxu0 %v85
    %v156 = vpop.f32.mrb[0].mxu0
    %v157 = vadd.f32 %v66, %v156
    %v158 = vpop.f32.mrb[0].mxu0
    %v159 = vadd.f32 %v70, %v158
    %160 = vmatprep.mubr.f32.mxu0 0.0
    %161 = vmatmul.mubr.f32.gmra.mrb[0].mxu0 %v88
    %v162 = vpop.f32.mrb[0].mxu0
    %v163 = vadd.f32 %v66, %v162
    %v164 = vpop.f32.mrb[0].mxu0
    %v165 = vadd.f32 %v70, %v164
    %166 = vdwg.mxu0
    %167 = vmatprep.subr.mxu0 %v48
    %168 = vmatpush1.msra.mxu0 %v47
    %169 = vmatprep.subr.mxu0 %v52
    %170 = vmatpush1.msra.mxu0 %v51
    %171 = vmatprep.subr.mxu0 %v56
    %172 = vmatpush1.msra.mxu0 %v55
    %173 = vmatprep.subr.mxu0 %v60
    %174 = vmatpush1.msra.mxu0 %v59
    %175 = vmatprep.subr.mxu0 0.0
    %176 = vmatpush1.msra.mxu0 0.0
    %177 = vmatprep.subr.mxu0 0.0
    %178 = vmatpush1.msra.mxu0 0.0
    %179 = vmatprep.subr.mxu0 0.0
    %180 = vmatpush1.msra.mxu0 0.0
    %181 = vmatprep.subr.mxu0 0.0
    %182 = vmatpush1.msra.mxu0 0.0
    %183 = vmatprep.subr.mxu0 0.0
    %184 = vmatpush1.msra.mxu0 0.0
    %185 = vmatprep.subr.mxu0 0.0
    %186 = vmatpush1.msra.mxu0 0.0
    %187 = vmatprep.subr.mxu0 0.0
    %188 = vmatpush1.msra.mxu0 0.0
    %189 = vmatprep.subr.mxu0 0.0
    %190 = vmatpush1.msra.mxu0 0.0
    %191 = vmatprep.subr.mxu0 0.0
    %192 = vmatpush1.msra.mxu0 0.0
    %193 = vmatprep.subr.mxu0 0.0
    %194 = vmatpush1.msra.mxu0 0.0
    %195 = vmatprep.subr.mxu0 0.0
    %196 = vmatpush1.msra.mxu0 0.0
    %197 = vmatprep.subr.mxu0 0.0
    %198 = vmatpush1.msra.mxu0 0.0
    %199 = vmatprep.subr.mxu0 0.0
    %200 = vmatpush1.msra.mxu0 0.0
    %201 = vmatprep.subr.mxu0 0.0
    %202 = vmatpush1.msra.mxu0 0.0
    %203 = vmatprep.subr.mxu0 0.0
    %204 = vmatpush1.msra.mxu0 0.0
    %205 = vmatprep.subr.mxu0 0.0
    %206 = vmatpush1.msra.mxu0 0.0
    %207 = vmatprep.subr.mxu0 0.0
    %208 = vmatpush1.msra.mxu0 0.0
    %209 = vmatprep.subr.mxu0 0.0
    %210 = vmatpush1.msra.mxu0 0.0
    %211 = vmatprep.subr.mxu0 0.0
    %212 = vmatpush1.msra.mxu0 0.0
    %213 = vmatprep.subr.mxu0 0.0
    %214 = vmatpush1.msra.mxu0 0.0
    %215 = vmatprep.subr.mxu0 0.0
    %216 = vmatpush1.msra.mxu0 0.0
    %217 = vmatprep.subr.mxu0 0.0
    %218 = vmatpush1.msra.mxu0 0.0
    %219 = vmatprep.subr.mxu0 0.0
    %220 = vmatpush1.msra.mxu0 0.0
    %221 = vmatprep.subr.mxu0 0.0
    %222 = vmatpush1.msra.mxu0 0.0
    %223 = vmatprep.subr.mxu0 0.0
    %224 = vmatpush1.msra.mxu0 0.0
    %225 = vmatprep.subr.mxu0 0.0
    %226 = vmatpush1.msra.mxu0 0.0
    %227 = vmatprep.subr.mxu0 0.0
    %228 = vmatpush1.msra.mxu0 0.0
    %229 = vmatprep.subr.mxu0 0.0
    %230 = vmatpush1.msra.mxu0 0.0
    %231 = vmatprep.mubr.f32.mxu0 0.0
    %232 = vmatmul.mubr.f32.gmra.mrb[0].mxu0 %v85
    %v233 = vpop.f32.mrb[0].mxu0
    %v234 = vadd.f32 %v74, %v233
    %v235 = vpop.f32.mrb[0].mxu0
    %v236 = vadd.f32 %v78, %v235
    %237 = vmatprep.mubr.f32.mxu0 0.0
    %238 = vmatmul.mubr.f32.gmra.mrb[0].mxu0 %v88
    %v239 = vpop.f32.mrb[0].mxu0
    %v240 = vadd.f32 %v74, %v239
    %v241 = vpop.f32.mrb[0].mxu0
    %v242 = vadd.f32 %v78, %v241
    %243 = vdwg.mxu0
    %244 = vst [vmem:[#allocation7] sm:$0xff] %v157
    %245 = vst [vmem:[#allocation7 + $0x8] sm:$0xff] %v159
    %246 = vst [vmem:[#allocation7 + $0x10] sm:$0xff] %v234
    %247 = vst [vmem:[#allocation7 + $0x18] sm:$0xff] %v236
    %248 = vst [vmem:[#allocation7 + $0x20] sm:$0xff] %v163
    %249 = vst [vmem:[#allocation7 + $0x28] sm:$0xff] %v165
    %250 = vst [vmem:[#allocation7 + $0x30] sm:$0xff] %v240
    %251 = vst [vmem:[#allocation7 + $0x38] sm:$0xff] %v242
    // Predicated region
    $region22: #{tpu_custom_call.1} parent=1 // pred_check
      _
    $region23: #{tpu_custom_call.1} parent=1 // pred_check_branch
      %253 = sbr.rel (0) target = $region25
    $region24: #{tpu_custom_call.1} parent=1 // pred_region
      %s255 = ssub.s32 1024, 1024
      %256 = vsyncadd [#allocation4], %s255
      %s257 = sshll.u32 [#allocation7], 4
      %s258 = int_to_ptr.vmem [resolvable:$true] %s257
      %263 = dma.vmem_to_hbm [thread:$0]  %s258, 1024, %s3, [#allocation4], 512, 512, 32
    $region25: #{tpu_custom_call.1} parent=1 // pred_fallthru
      _
    // Predicated region
    $region26: #{tpu_custom_call.1} parent=1 // pred_check
      _
    $region27: #{tpu_custom_call.1} parent=1 // pred_check_branch
      %265 = sbr.rel (0) target = $region29
    $region28: #{tpu_custom_call.1} parent=1 // pred_region
      %266 = dma.done [#allocation4], 1024
    $region29: #{tpu_custom_call.1} parent=1 // pred_fallthru
      _
    %267 = vsyncpa [#allocation3], 1
    %268 = vsyncpa [#allocation6], 1
    %269 = vsyncpa [#allocation4], 1

</llo_original>
